<compile_context>
chip_gen: v7x
topology: tpu7x:2x2x1
jax: 0.10.0
libtpu: 0.0.40
codegen_flags: <defaults>
</compile_context>

<pallas_src>
import functools

import jax
import jax.numpy as jnp
from jax.experimental import pallas as pl
from jax.experimental.pallas import tpu as pltpu


def _is_pow2(n: int) -> bool:
    return n > 0 and (n & (n - 1)) == 0


# ---------------------------------------------------------------------------
# Butterfly reverse kernel (f32 and other non-bf16 dtypes).
#
#   o = x - reverse_within_each_W_segment(x)
#
# The last dim of the block is a multiple of 128 lanes.  Each 128-lane segment
# is processed with static slices; within a segment, aligned seg_w-wide groups
# are reversed by a log2(seg_w)-stage butterfly: stage b swaps aligned lane
# blocks of size b (y[i] = x[i ^ b]).  Rolls run on the XLU, selects on the
# VPU.  Stage masks are built at (1, 128) from a rolled lane iota, which makes
# them independent of pltpu.roll's rotate convention and hoists all mask
# arithmetic off the per-element path.
# ---------------------------------------------------------------------------
def _diff_flip_butterfly_kernel(x_ref, o_ref, *, seg_w):
    lanes = x_ref.shape[-1]
    n_seg = lanes // 128

    lane = jax.lax.broadcasted_iota(jnp.int32, (1, 128), 1)
    stages = []
    b = 1
    while b < seg_w:
        sa = b
        sb = (128 - b) % 128
        ia = pltpu.roll(lane, sa, axis=1)       # where did data rolled by sa come from?
        mask = ia == (lane ^ b)                 # True -> roll-by-sa holds x[i ^ b]
        stages.append((sa, sb, mask))
        b *= 2

    for m in range(n_seg):
        # Full-width (W >= 128) reverse also swaps the 128-lane segments.
        src = (n_seg - 1 - m) if seg_w == 128 else m
        y = x_ref[:, src * 128:(src + 1) * 128]
        for sa, sb, mask in stages:
            ra = pltpu.roll(y, sa, axis=1)
            rb = pltpu.roll(y, sb, axis=1)
            y = jnp.where(mask, ra, rb)         # (1,128) mask broadcasts over rows
        o_ref[:, m * 128:(m + 1) * 128] = x_ref[:, m * 128:(m + 1) * 128] - y


# ---------------------------------------------------------------------------
# MXU reverse kernel (bf16): lane reversal within each seg_w group of a
# 128-lane segment is an exact 0/1 permutation matmul (J columns have exactly
# one 1, accumulation in f32), done on the otherwise-idle MXU so the XLU/VPU
# stay clear and the kernel sits on the HBM roofline on v6e/v7x.
# ---------------------------------------------------------------------------
def _diff_flip_mxu_kernel(x_ref, j_ref, o_ref, *, seg_w):
    lanes = x_ref.shape[-1]
    n_seg = lanes // 128
    j = j_ref[...]
    for m in range(n_seg):
        src = (n_seg - 1 - m) if seg_w == 128 else m
        seg = x_ref[:, src * 128:(src + 1) * 128]
        flip = jnp.dot(seg, j, preferred_element_type=jnp.float32).astype(seg.dtype)
        o_ref[:, m * 128:(m + 1) * 128] = x_ref[:, m * 128:(m + 1) * 128] - flip


def _reversal_matrix(seg_w, dtype):
    """128x128 0/1 matrix reversing each aligned seg_w-wide lane group."""
    idx = jnp.arange(128)
    same_block = (idx[:, None] // seg_w) == (idx[None, :] // seg_w)
    rev = (idx[:, None] % seg_w) + (idx[None, :] % seg_w) == seg_w - 1
    return (same_block & rev).astype(dtype)


def _pick_tm(num_rows, lanes, itemsize, *, target_bytes=4 << 20, min_blocks=8):
    """Row-tile size: ~4 MiB per block, rounded to the dtype's sublane packing
    (8 for f32, 16 for bf16, 32 for int8/fp8), capped so mid-sized tensors
    still produce several grid steps (both v7x TensorCores engage)."""
    sublane = max(8, 32 // itemsize)
    tm = (target_bytes // (lanes * itemsize)) // sublane * sublane
    tm = max(sublane, tm)
    if num_rows >= sublane:
        tm = min(tm, num_rows // sublane * sublane)
    if num_rows > min_blocks * sublane:
        per_block = -(-num_rows // min_blocks)           # ceil(num_rows / min_blocks)
        per_block = -(-per_block // sublane) * sublane   # round up to sublane
        tm = min(tm, per_block)
    return max(sublane, tm)


def get_difference_forward(x, conv_w=None, bn_gamma=None, bn_beta=None,
                           bn_mean=None, bn_var=None, eps=1e-5):
    """Forward of `get_difference`: returns x - flip(x, W) for NCHW x.

    TODO(synk): the PyTorch reference also computes relu(bn1(conv1(diff))) and
    throws the result away; that dead branch (and its parameters) cannot affect
    the returned tensor, so it is omitted here instead of being re-materialized.
    """
    N, C, H, W = x.shape
    dtype = x.dtype
    itemsize = jnp.dtype(dtype).itemsize
    sublane = max(8, 32 // itemsize)
    rows = N * C * H

    if W % 128 == 0 and W > 0:
        lanes, pack, seg_w = W, 1, 128            # lane-dense; per-128 segments
    elif W < 128 and _is_pow2(W):
        lanes, pack, seg_w = 128, 128 // W, W     # pack rows into 128-lane rows
    else:
        # TODO(synk): widths that are neither a multiple of 128 nor a power of
        # two < 128 fall back to XLA's exact flip (mem-bound anyway); a Pallas
        # path would need masked lane gathers.
        return x - jnp.flip(x, axis=3)

    # Pad with <= pack*sublane-1 dummy rows so the packed view is lane-dense
    # and sublane-aligned (unmasked vector stores), then slice them off.
    row_align = pack * sublane
    pad = (-rows) % row_align
    x2 = x.reshape(rows, W)
    if pad:
        x2 = jnp.concatenate([x2, jnp.zeros((pad, W), dtype)], axis=0)
    rows2 = (rows + pad) // pack
    x2 = x2.reshape(rows2, lanes)                 # contiguous -> free reshape

    tm = _pick_tm(rows2, lanes, itemsize)
    grid = (pl.cdiv(rows2, tm),)

    compiler_params = pltpu.CompilerParams(
        dimension_semantics=("parallel",),        # shard row-grid across TCs
        vmem_limit_bytes=32 * 1024 * 1024,        # 2 arrays x 2 bufs x ~4 MiB + temps
    )
    cost = pl.CostEstimate(
        flops=rows2 * lanes,
        transcendentals=0,
        bytes_accessed=2 * rows2 * lanes * itemsize,
    )

    use_mxu = dtype == jnp.bfloat16               # exact: J is a 0/1 permutation

    if use_mxu:
        kernel = functools.partial(_diff_flip_mxu_kernel, seg_w=seg_w)
        J = _reversal_matrix(seg_w, dtype)
        diff2 = pl.pallas_call(
            kernel,
            out_shape=jax.ShapeDtypeStruct((rows2, lanes), dtype),
            grid=grid,
            in_specs=[pl.BlockSpec((tm, lanes), lambda i: (i, 0)),
                      pl.BlockSpec((128, 128), lambda i: (0, 0))],
            out_specs=pl.BlockSpec((tm, lanes), lambda i: (i, 0)),
            compiler_params=compiler_params,
            cost_estimate=cost,
        )(x2, J)
    else:
        kernel = functools.partial(_diff_flip_butterfly_kernel, seg_w=seg_w)
        diff2 = pl.pallas_call(
            kernel,
            out_shape=jax.ShapeDtypeStruct((rows2, lanes), dtype),
            grid=grid,
            in_specs=[pl.BlockSpec((tm, lanes), lambda i: (i, 0))],
            out_specs=pl.BlockSpec((tm, lanes), lambda i: (i, 0)),
            compiler_params=compiler_params,
            cost_estimate=cost,
        )(x2)

    diff = diff2.reshape(rows + pad, W)
    if pad:
        diff = diff[:rows]
    return diff.reshape(N, C, H, W)


if __name__ == "__main__":
    key = jax.random.PRNGKey(0)

    def ref_diff(a):
        return a - jnp.flip(a, axis=3)

    # 1) f32, W < 128 (rows packed into 128-lane rows, butterfly within W).
    x1 = jax.random.normal(key, (2, 4, 16, 16), dtype=jnp.float32)
    y1 = jax.block_until_ready(get_difference_forward(x1))
    assert y1.shape == x1.shape
    assert jnp.allclose(y1, ref_diff(x1), atol=1e-6), "f32 W<128 mismatch"

    # 2) f32, W multiple of 128 (per-128-segment butterfly + segment swap).
    x2 = jax.random.normal(jax.random.fold_in(key, 1), (2, 4, 8, 256),
                           dtype=jnp.float32)
    y2 = jax.block_until_ready(get_difference_forward(x2))
    assert jnp.allclose(y2, ref_diff(x2), atol=1e-6), "f32 W=256 mismatch"

    # 3) bf16, W multiple of 128 (exact MXU reversal-matrix path).
    x3 = jax.random.normal(jax.random.fold_in(key, 2), (2, 4, 8, 256),
                           dtype=jnp.float32).astype(jnp.bfloat16)
    y3 = jax.block_until_ready(get_difference_forward(x3))
    assert jnp.allclose(y3.astype(jnp.float32),
                        ref_diff(x3).astype(jnp.float32),
                        atol=1e-2), "bf16 W=256 mismatch"

    # 4) f32, W < 128 with row padding (rows don't pack evenly).
    x4 = jax.random.normal(jax.random.fold_in(key, 3), (1, 3, 5, 16),
                           dtype=jnp.float32)
    y4 = jax.block_until_ready(get_difference_forward(x4))
    assert jnp.allclose(y4, ref_diff(x4), atol=1e-6), "padded-rows mismatch"

    print("KERNEL_OK")
</pallas_src>

<mosaic_0001>
module attributes {stable_mosaic.version = 11 : i64} {
  func.func @_diff_flip_butterfly_kernel(%arg0: i32, %arg1: memref<16x128xf32, #tpu.memory_space<vmem>>, %arg2: memref<16x128xf32, #tpu.memory_space<vmem>>) attributes {dimension_semantics = [#tpu.dimension_semantics<parallel>], iteration_bounds = array<i64: 1>, scalar_prefetch = 0 : i64, scratch_operands = 0 : i64, tpu.core_type = #tpu.core_type<tc>, window_params = [{transform_indices = @transform_0, window_bounds = array<i64: 16, 128>}, {transform_indices = @transform_1, window_bounds = array<i64: 16, 128>}]} {
    %0 = tpu.iota {dimensions = array<i32: 1>} : vector<1x128xi32>
    %c1_i32 = arith.constant 1 : i32
    %1 = tpu.dynamic_rotate %0 by %c1_i32 dim 1 : vector<1x128xi32>, i32 -> vector<1x128xi32>
    %c1_i32_0 = arith.constant 1 : i32
    %2 = vector.broadcast %c1_i32_0 : i32 to vector<1x128xi32>
    %3 = arith.xori %0, %2 : vector<1x128xi32>
    %4 = arith.cmpi eq, %1, %3 : vector<1x128xi32>
    %c2_i32 = arith.constant 2 : i32
    %5 = tpu.dynamic_rotate %0 by %c2_i32 dim 1 : vector<1x128xi32>, i32 -> vector<1x128xi32>
    %c2_i32_1 = arith.constant 2 : i32
    %6 = vector.broadcast %c2_i32_1 : i32 to vector<1x128xi32>
    %7 = arith.xori %0, %6 : vector<1x128xi32>
    %8 = arith.cmpi eq, %5, %7 : vector<1x128xi32>
    %c4_i32 = arith.constant 4 : i32
    %9 = tpu.dynamic_rotate %0 by %c4_i32 dim 1 : vector<1x128xi32>, i32 -> vector<1x128xi32>
    %c4_i32_2 = arith.constant 4 : i32
    %10 = vector.broadcast %c4_i32_2 : i32 to vector<1x128xi32>
    %11 = arith.xori %0, %10 : vector<1x128xi32>
    %12 = arith.cmpi eq, %9, %11 : vector<1x128xi32>
    %c8_i32 = arith.constant 8 : i32
    %13 = tpu.dynamic_rotate %0 by %c8_i32 dim 1 : vector<1x128xi32>, i32 -> vector<1x128xi32>
    %c8_i32_3 = arith.constant 8 : i32
    %14 = vector.broadcast %c8_i32_3 : i32 to vector<1x128xi32>
    %15 = arith.xori %0, %14 : vector<1x128xi32>
    %16 = arith.cmpi eq, %13, %15 : vector<1x128xi32>
    %c0 = arith.constant 0 : index
    %c0_4 = arith.constant 0 : index
    %17 = vector.load %arg1[%c0, %c0_4] : memref<16x128xf32, #tpu.memory_space<vmem>>, vector<16x128xf32>
    %c1_i32_5 = arith.constant 1 : i32
    %18 = tpu.dynamic_rotate %17 by %c1_i32_5 dim 1 : vector<16x128xf32>, i32 -> vector<16x128xf32>
    %c127_i32 = arith.constant 127 : i32
    %19 = tpu.dynamic_rotate %17 by %c127_i32 dim 1 : vector<16x128xf32>, i32 -> vector<16x128xf32>
    %20 = vector.shape_cast %4 : vector<1x128xi1> to vector<1x128xi1>
    %21 = vector.broadcast %20 : vector<1x128xi1> to vector<16x128xi1>
    %22 = arith.select %21, %18, %19 : vector<16x128xi1>, vector<16x128xf32>
    %c2_i32_6 = arith.constant 2 : i32
    %23 = tpu.dynamic_rotate %22 by %c2_i32_6 dim 1 : vector<16x128xf32>, i32 -> vector<16x128xf32>
    %c126_i32 = arith.constant 126 : i32
    %24 = tpu.dynamic_rotate %22 by %c126_i32 dim 1 : vector<16x128xf32>, i32 -> vector<16x128xf32>
    %25 = vector.shape_cast %8 : vector<1x128xi1> to vector<1x128xi1>
    %26 = vector.broadcast %25 : vector<1x128xi1> to vector<16x128xi1>
    %27 = arith.select %26, %23, %24 : vector<16x128xi1>, vector<16x128xf32>
    %c4_i32_7 = arith.constant 4 : i32
    %28 = tpu.dynamic_rotate %27 by %c4_i32_7 dim 1 : vector<16x128xf32>, i32 -> vector<16x128xf32>
    %c124_i32 = arith.constant 124 : i32
    %29 = tpu.dynamic_rotate %27 by %c124_i32 dim 1 : vector<16x128xf32>, i32 -> vector<16x128xf32>
    %30 = vector.shape_cast %12 : vector<1x128xi1> to vector<1x128xi1>
    %31 = vector.broadcast %30 : vector<1x128xi1> to vector<16x128xi1>
    %32 = arith.select %31, %28, %29 : vector<16x128xi1>, vector<16x128xf32>
    %c8_i32_8 = arith.constant 8 : i32
    %33 = tpu.dynamic_rotate %32 by %c8_i32_8 dim 1 : vector<16x128xf32>, i32 -> vector<16x128xf32>
    %c120_i32 = arith.constant 120 : i32
    %34 = tpu.dynamic_rotate %32 by %c120_i32 dim 1 : vector<16x128xf32>, i32 -> vector<16x128xf32>
    %35 = vector.shape_cast %16 : vector<1x128xi1> to vector<1x128xi1>
    %36 = vector.broadcast %35 : vector<1x128xi1> to vector<16x128xi1>
    %37 = arith.select %36, %33, %34 : vector<16x128xi1>, vector<16x128xf32>
    %c0_9 = arith.constant 0 : index
    %c0_10 = arith.constant 0 : index
    %38 = vector.load %arg1[%c0_9, %c0_10] : memref<16x128xf32, #tpu.memory_space<vmem>>, vector<16x128xf32>
    %39 = arith.subf %38, %37 : vector<16x128xf32>
    %c0_11 = arith.constant 0 : index
    %c0_12 = arith.constant 0 : index
    %40 = vector.load %arg2[%c0_11, %c0_12] : memref<16x128xf32, #tpu.memory_space<vmem>>, vector<16x128xf32>
    tpu.vector_store %arg2[%c0_11, %c0_12], %39 {strides = array<i32>} : memref<16x128xf32, #tpu.memory_space<vmem>>, vector<16x128xf32>,
    return
  }
  func.func @transform_0(%arg0: i32) -> (i32, i32) {
    %c0_i32 = arith.constant 0 : i32
    %c0_i32_0 = arith.constant 0 : i32
    return %arg0, %c0_i32 : i32, i32
  }
  func.func @transform_1(%arg0: i32) -> (i32, i32) {
    %c0_i32 = arith.constant 0 : i32
    %c0_i32_0 = arith.constant 0 : i32
    return %arg0, %c0_i32 : i32, i32
  }
}

</mosaic_0001>

<llo_original>
// kernel: tpu_custom_call.1
$region0: #{tpu_custom_call.1}
  #allocation0 [shape = 'u32[]', space=smem, size = 0x4, offset = 0x4, fixed_abs, tag = 'smem constant byte address 0x4 - core index']
  #allocation1 [shape = 'u32[144,128]{1,0:T(1,128)}', space=vmem, size = 0x12000, scoped, tag = 'internal scratch']
  %s0 = inlined_call_operand.hbm [shape: f32[16,128], index: 0, kind: input, shape index: {}]
  %s1 = inlined_call_operand.hbm [shape: f32[16,128], index: 1, kind: output, shape index: {}]
  %s2 = sld [smem:[#allocation0]]
  $region18: #{tpu_custom_call.1} parent=0
    _
  %s4 = ssub.s32 1, %s2
  %s5 = scalar_select 0, %s4, %s2
  $region1: #{tpu_custom_call.1} parent=0
    #allocation2 [shape = 'u8[8192]{0}', space=vmem, size = 0x2000, scoped, tag = 'input window, operand 0, single buffered']
    #allocation3 [shape = 's32[1]{0}', space=sflag, size = 0x4, scoped, tag = 'scoped memory for tpu_custom_call.1']
    #allocation4 [shape = 's32[1]{0}', space=sflag, size = 0x4, scoped, tag = 'scoped memory for tpu_custom_call.1']
    #allocation5 [shape = 'u8[8192]{0}', space=vmem, size = 0x2000, scoped, tag = 'output window, operand 0, single buffered']
    %6 = vsyncpa [#allocation3], 0
    %7 = vsyncpa [#allocation4], 0
    // Predicated region
    $region2: #{tpu_custom_call.1} parent=1 // pred_check
      _
    $region3: #{tpu_custom_call.1} parent=1 // pred_check_branch
      %9 = sbr.rel (0) target = $region5
    $region4: #{tpu_custom_call.1} parent=1 // pred_region
      %s11 = ssub.s32 256, 256
      %12 = vsyncadd [#allocation3], %s11
      %s13 = sshll.u32 [#allocation2], 4
      %s14 = int_to_ptr.vmem [resolvable:$true] %s13
      %19 = dma.hbm_to_vmem [thread:$0]  %s0, 256, %s14, [#allocation3], 128, 128, 8
    $region5: #{tpu_custom_call.1} parent=1 // pred_fallthru
      _
    // Predicated region
    $region6: #{tpu_custom_call.1} parent=1 // pred_check
      _
    $region7: #{tpu_custom_call.1} parent=1 // pred_check_branch
      %21 = sbr.rel (0) target = $region9
    $region8: #{tpu_custom_call.1} parent=1 // pred_region
      %22 = dma.done [#allocation3], 256
    $region9: #{tpu_custom_call.1} parent=1 // pred_fallthru
      _
    %v23 = vlaneseq
    %v24 = vand.u32 %v23, 127
    %25 = vrot.lane.b32.xlu0 %v24, 1
    %v26 = vpop.permute.xlu0 %25
    %v27 = vxor.u32 %v24, 1
    %vm28 = vcmp.eq.s32.totalorder %v26, %v27
    %29 = vrot.lane.b32.xlu0 %v24, 2
    %v30 = vpop.permute.xlu0 %29
    %v31 = vxor.u32 %v24, 2
    %vm32 = vcmp.eq.s32.totalorder %v30, %v31
    %33 = vrot.lane.b32.xlu0 %v24, 4
    %v34 = vpop.permute.xlu0 %33
    %v35 = vxor.u32 %v24, 4
    %vm36 = vcmp.eq.s32.totalorder %v34, %v35
    %37 = vrot.lane.b32.xlu0 %v24, 8
    %v38 = vpop.permute.xlu0 %37
    %v39 = vxor.u32 %v24, 8
    %vm40 = vcmp.eq.s32.totalorder %v38, %v39
    %v41 = vld [vmem:[#allocation2] sm:$0xff]
    %v42 = vld [vmem:[#allocation2 + $0x8] sm:$0xff]
    %43 = vrot.lane.b32.xlu0 %v41, 1
    %v44 = vpop.permute.xlu0 %43
    %45 = vrot.lane.b32.xlu0 %v42, 1
    %v46 = vpop.permute.xlu0 %45
    %47 = vrot.lane.b32.xlu0 %v41, 127
    %v48 = vpop.permute.xlu0 %47
    %49 = vrot.lane.b32.xlu0 %v42, 127
    %v50 = vpop.permute.xlu0 %49
    %v51 = vsel %vm28, 1, 0
    %v52 = vlaneseq
    %v53 = vshrl.u32 %v52, 7
    %v54 = vsub.s32 0, %v53
    %v55 = vrot.slane %v51, %v54
    %vm56 = vcmp.eq.s32.totalorder %v55, 1
    %v57 = vsel %vm56, %v44, %v48
    %v58 = vsel %vm56, %v46, %v50
    %59 = vrot.lane.b32.xlu0 %v57, 2
    %v60 = vpop.permute.xlu0 %59
    %61 = vrot.lane.b32.xlu0 %v58, 2
    %v62 = vpop.permute.xlu0 %61
    %63 = vrot.lane.b32.xlu0 %v57, 126
    %v64 = vpop.permute.xlu0 %63
    %65 = vrot.lane.b32.xlu0 %v58, 126
    %v66 = vpop.permute.xlu0 %65
    %v67 = vsel %vm32, 1, 0
    %v68 = vlaneseq
    %v69 = vshrl.u32 %v68, 7
    %v70 = vsub.s32 0, %v69
    %v71 = vrot.slane %v67, %v70
    %vm72 = vcmp.eq.s32.totalorder %v71, 1
    %v73 = vsel %vm72, %v60, %v64
    %v74 = vsel %vm72, %v62, %v66
    %75 = vrot.lane.b32.xlu0 %v73, 4
    %v76 = vpop.permute.xlu0 %75
    %77 = vrot.lane.b32.xlu0 %v74, 4
    %v78 = vpop.permute.xlu0 %77
    %79 = vrot.lane.b32.xlu0 %v73, 124
    %v80 = vpop.permute.xlu0 %79
    %81 = vrot.lane.b32.xlu0 %v74, 124
    %v82 = vpop.permute.xlu0 %81
    %v83 = vsel %vm36, 1, 0
    %v84 = vlaneseq
    %v85 = vshrl.u32 %v84, 7
    %v86 = vsub.s32 0, %v85
    %v87 = vrot.slane %v83, %v86
    %vm88 = vcmp.eq.s32.totalorder %v87, 1
    %v89 = vsel %vm88, %v76, %v80
    %v90 = vsel %vm88, %v78, %v82
    %91 = vrot.lane.b32.xlu0 %v89, 8
    %v92 = vpop.permute.xlu0 %91
    %93 = vrot.lane.b32.xlu0 %v90, 8
    %v94 = vpop.permute.xlu0 %93
    %95 = vrot.lane.b32.xlu0 %v89, 120
    %v96 = vpop.permute.xlu0 %95
    %97 = vrot.lane.b32.xlu0 %v90, 120
    %v98 = vpop.permute.xlu0 %97
    %v99 = vsel %vm40, 1, 0
    %v100 = vlaneseq
    %v101 = vshrl.u32 %v100, 7
    %v102 = vsub.s32 0, %v101
    %v103 = vrot.slane %v99, %v102
    %vm104 = vcmp.eq.s32.totalorder %v103, 1
    %v105 = vsel %vm104, %v92, %v96
    %v106 = vsel %vm104, %v94, %v98
    %v107 = vsub.f32 %v41, %v105
    %v108 = vsub.f32 %v42, %v106
    %109 = vst [vmem:[#allocation5] sm:$0xff] %v107
    %110 = vst [vmem:[#allocation5 + $0x8] sm:$0xff] %v108
    // Predicated region
    $region10: #{tpu_custom_call.1} parent=1 // pred_check
      _
    $region11: #{tpu_custom_call.1} parent=1 // pred_check_branch
      %112 = sbr.rel (0) target = $region13
    $region12: #{tpu_custom_call.1} parent=1 // pred_region
      %s114 = ssub.s32 256, 256
      %115 = vsyncadd [#allocation4], %s114
      %s116 = sshll.u32 [#allocation5], 4
      %s117 = int_to_ptr.vmem [resolvable:$true] %s116
      %122 = dma.vmem_to_hbm [thread:$0]  %s117, 256, %s1, [#allocation4], 128, 128, 8
    $region13: #{tpu_custom_call.1} parent=1 // pred_fallthru
      _
    // Predicated region
    $region14: #{tpu_custom_call.1} parent=1 // pred_check
      _
    $region15: #{tpu_custom_call.1} parent=1 // pred_check_branch
      %124 = sbr.rel (0) target = $region17
    $region16: #{tpu_custom_call.1} parent=1 // pred_region
      %125 = dma.done [#allocation4], 256
    $region17: #{tpu_custom_call.1} parent=1 // pred_fallthru
      _
    %126 = vsyncpa [#allocation3], 1
    %127 = vsyncpa [#allocation4], 1

</llo_original>
